<compile_context>
chip_gen: v6e
topology: v6e:2x2x1
jax: 0.10.0
libtpu: 0.0.40
codegen_flags: <defaults>
</compile_context>

<pallas_src>
import jax
import jax.numpy as jnp
from jax.experimental import pallas as pl
from jax.experimental.pallas import tpu as pltpu


# ----------------------------------------------------------------------------
# Debug identity copy: direct HBM -> HBM DMA (no VMEM round trip).
# ----------------------------------------------------------------------------

# Below this size the Pallas launch overhead dominates; return a plain copy.
_MIN_PALLAS_BYTES = 1 << 20          # 1 MiB
# Only chunk into multiple DMAs once each chunk is comfortably large.
_CHUNK_BYTES = 8 << 20               # ~8 MiB per DMA chunk
_MAX_DMA_CHUNKS = 4


def _choose_2d_shape(total: int) -> tuple[int, int]:
    """Pick a (rows, cols) factorization, preferring lane-dense columns."""
    for c in (2048, 1024, 512, 256, 128):
        if total % c == 0:
            return total // c, c
    # Layout-agnostic fallback: single row, one contiguous DMA.
    return 1, total


def _make_hbm_copy_kernel(rows: int, num_chunks: int):
    """Build a kernel issuing `num_chunks` HBM->HBM DMAs over row ranges."""
    rows_per_chunk = pl.cdiv(rows, num_chunks)

    def kernel(x_hbm, o_hbm, sems):
        copies = []
        # Static Python loop: all slice bounds are compile-time constants.
        for c in range(num_chunks):
            start = c * rows_per_chunk
            size = min(rows_per_chunk, rows - start)
            cp = pltpu.make_async_copy(
                x_hbm.at[pl.ds(start, size)],
                o_hbm.at[pl.ds(start, size)],
                sems.at[c],
            )
            cp.start()
            copies.append(cp)
        for cp in copies:
            cp.wait()

    return kernel


def _identity_pallas_2d(x2d: jax.Array) -> jax.Array:
    """Copy a 2-D array with one (or a few) direct HBM->HBM DMAs."""
    rows, cols = x2d.shape
    itemsize = jnp.dtype(x2d.dtype).itemsize
    total_bytes = rows * cols * itemsize

    # Chunk only when each chunk stays large enough to amortize DMA issue cost.
    num_chunks = max(1, min(_MAX_DMA_CHUNKS, rows, total_bytes // _CHUNK_BYTES))

    kernel = _make_hbm_copy_kernel(rows, num_chunks)

    return pl.pallas_call(
        kernel,
        out_shape=jax.ShapeDtypeStruct((rows, cols), x2d.dtype),
        in_specs=[pl.BlockSpec(memory_space=pl.ANY)],
        out_specs=pl.BlockSpec(memory_space=pl.ANY),
        scratch_shapes=[pltpu.SemaphoreType.DMA((num_chunks,))],
    )(x2d)


def _identity_copy(x: jax.Array, *, min_bytes: int = _MIN_PALLAS_BYTES) -> jax.Array:
    """Identity copy of an arbitrary-rank tensor (debug / test path only)."""
    total = x.size
    if total * jnp.dtype(x.dtype).itemsize < min_bytes and min_bytes > 0:
        # Too small for a Pallas launch to be worthwhile: plain XLA copy.
        return x + jnp.zeros((), dtype=x.dtype)

    rows, cols = _choose_2d_shape(total)
    flat = x.reshape(rows, cols)
    out = _identity_pallas_2d(flat)
    return out.reshape(x.shape)


# ----------------------------------------------------------------------------
# StyleTTS port — reference forward() performs no computation.
# ----------------------------------------------------------------------------

class StyleTTSPallas:
    """JAX/Pallas port of style_tts.Networks.model.StyleTTS.

    The reference module holds no parameters; __init__ is deliberately empty
    and forward() performs no computation and returns None.
    """

    def __init__(self):
        pass

    def forward(self, x: jax.Array):
        # Reference forward: `pass` -> returns None.  No device work is done.
        del x
        return None

    __call__ = forward


if __name__ == "__main__":
    key = jax.random.PRNGKey(0)
    # Small NCHW input consistent with a generic tensor forward: B=2, C=4, 16x16.
    x = jax.random.normal(key, (2, 4, 16, 16), dtype=jnp.float32)

    model = StyleTTSPallas()
    result = model(x)
    assert result is None, "StyleTTS.forward must return None (reference semantics)"

    # Exercise the debug HBM->HBM DMA kernel once (force past the small-tensor
    # threshold so the Pallas path is actually validated on device).
    kernel_out = jax.block_until_ready(_identity_copy(x, min_bytes=0))
    assert kernel_out.shape == x.shape
    assert kernel_out.dtype == x.dtype
    assert bool(jnp.all(kernel_out == x)), "Pallas identity copy mismatch"

    print("KERNEL_OK")
</pallas_src>

<mosaic_0001>
module attributes {stable_mosaic.version = 11 : i64} {
  func.func @kernel(%arg0: memref<1x2048xf32, #tpu.memory_space<any>>, %arg1: memref<1x2048xf32, #tpu.memory_space<any>>, %arg2: memref<1x!tpu.dma_semaphore, #tpu.memory_space<semaphore_mem>>) attributes {dimension_semantics = [], scalar_prefetch = 0 : i64, scratch_operands = 1 : i64, tpu.core_type = #tpu.core_type<tc>} {
    %c0_i32 = arith.constant 0 : i32
    %c0_i32_0 = arith.constant 0 : i32
    %c0_i32_1 = arith.constant 0 : i32
    %0 = tpu.memref_slice %arg0[%c0_i32_0, %c0_i32_1] : memref<1x2048xf32, #tpu.memory_space<any>> -> memref<1x2048xf32, #tpu.memory_space<any>>
    %c0_i32_2 = arith.constant 0 : i32
    %c0_i32_3 = arith.constant 0 : i32
    %1 = tpu.memref_slice %arg1[%c0_i32_2, %c0_i32_3] : memref<1x2048xf32, #tpu.memory_space<any>> -> memref<1x2048xf32, #tpu.memory_space<any>>
    %2 = tpu.memref_slice %arg2[%c0_i32] : memref<1x!tpu.dma_semaphore, #tpu.memory_space<semaphore_mem>> -> memref<1x!tpu.dma_semaphore, #tpu.memory_space<semaphore_mem>>
    %3 = tpu.memref_squeeze %2 : memref<1x!tpu.dma_semaphore, #tpu.memory_space<semaphore_mem>> -> memref<!tpu.dma_semaphore, #tpu.memory_space<semaphore_mem>>
    tpu.enqueue_dma source(%0 : memref<1x2048xf32, #tpu.memory_space<any>>) target(%1 : memref<1x2048xf32, #tpu.memory_space<any>>) target_semaphore(%3 : memref<!tpu.dma_semaphore, #tpu.memory_space<semaphore_mem>>)
    %c0_i32_4 = arith.constant 0 : i32
    %c0_i32_5 = arith.constant 0 : i32
    %c0_i32_6 = arith.constant 0 : i32
    %4 = tpu.memref_slice %arg0[%c0_i32_5, %c0_i32_6] : memref<1x2048xf32, #tpu.memory_space<any>> -> memref<1x2048xf32, #tpu.memory_space<any>>
    %c0_i32_7 = arith.constant 0 : i32
    %c0_i32_8 = arith.constant 0 : i32
    %5 = tpu.memref_slice %arg1[%c0_i32_7, %c0_i32_8] : memref<1x2048xf32, #tpu.memory_space<any>> -> memref<1x2048xf32, #tpu.memory_space<any>>
    %6 = tpu.memref_slice %arg2[%c0_i32_4] : memref<1x!tpu.dma_semaphore, #tpu.memory_space<semaphore_mem>> -> memref<1x!tpu.dma_semaphore, #tpu.memory_space<semaphore_mem>>
    %7 = tpu.memref_squeeze %6 : memref<1x!tpu.dma_semaphore, #tpu.memory_space<semaphore_mem>> -> memref<!tpu.dma_semaphore, #tpu.memory_space<semaphore_mem>>
    tpu.wait_dma2 semaphore(%7 : memref<!tpu.dma_semaphore, #tpu.memory_space<semaphore_mem>>) src(%4 : memref<1x2048xf32, #tpu.memory_space<any>>) dst(%5 : memref<1x2048xf32, #tpu.memory_space<any>>)
    return
  }
}

</mosaic_0001>

<llo_original>
// kernel: tpu_custom_call.1
$region0: #{tpu_custom_call.1}
  #allocation0 [shape = 'u32[]', space=smem, size = 0x4, offset = 0x4, fixed_abs, tag = 'smem constant byte address 0x4 - core index']
  #allocation1 [shape = 'u32[144,128]{1,0:T(1,128)}', space=vmem, size = 0x12000, scoped, tag = 'internal scratch']
  #allocation2 [shape = 's32[1]{0}', space=sflag, size = 0x4, scoped, tag = 'scratch operand']
  #allocation3 [shape = 's32[]', space=sflag, size = 0x4, offset = 0, fixed_abs, tag = 'sflag constant byte address 0x0 - dummy sync flag']
  #allocation4 [shape = 'u32[0]{0}', space=smem, size = 0, offset = 0, fixed_abs, tag = 'smem constant byte address 0x0 - null']
  %s0 = inlined_call_operand.hbm [shape: f32[1,2048], index: 0, kind: input, shape index: {}]
  %s1 = inlined_call_operand.hbm [shape: f32[1,2048], index: 1, kind: output, shape index: {}]
  %s2 = sld [smem:[#allocation0]]
  $region2: #{tpu_custom_call.1} parent=0
    _
  %s4 = ssub.s32 1, %s2
  %s5 = scalar_select 0, %s4, %s2
  %s7 = sshll.u32 1, 14
  %s8 = sxor.u32 4294967295, %s7
  %12 = dma.general %s0, 256, %s1, [#allocation2], 131072, [#allocation4], 0, 0
  %s13 = smul.u32 1, 16
  %s14 = sshll.u32 %s13, 4
  %15 = dma.done [#allocation2], %s14
  %16 = vsyncmov [#allocation2]
  %s17 = vpop.sfrf %16
  %p18 = scmp.eq.s32.totalorder %s17, 0
  %p19 = pneg %p18
  %21 = shalt.err (%p19)

</llo_original>
